<compile_context>
chip_gen: v5e
topology: v5e:2x2
jax: 0.10.0
libtpu: 0.0.40
codegen_flags: <defaults>
</compile_context>

<pallas_src>
import functools

import numpy as np

import jax
import jax.numpy as jnp
from jax.experimental import pallas as pl
from jax.experimental.pallas import tpu as pltpu


def _shared_mlp_kernel(x_ref, w_ref, bc_ref, g_ref, bt_ref, o_ref, *, B, eps):
    """SharedMLP forward, everything resident in VMEM.

    x_ref : (B, d_in, L)   L = N*K on the lane axis
    w_ref : (d_out, d_in)  1x1 conv weight
    bc_ref: (d_out, 1)     conv bias
    g_ref : (d_out, 1)     BN gamma
    bt_ref: (d_out, 1)     BN beta
    o_ref : (B, d_out, L)
    """
    w = w_ref[...].astype(jnp.bfloat16)          # single-pass bf16 MXU, f32 accumulate
    bc = bc_ref[...]                             # (d_out, 1)

    # --- 1x1 conv: per-point channel matmul, one MXU call per batch element.
    #     (bc is constant over (B, N, K) per channel, so it cancels under train-mode
    #      BN; kept for fidelity to the module forward.)
    ys = []
    for b in range(B):                           # static unroll, B is small
        xb = x_ref[b].astype(jnp.bfloat16)       # (d_in, L)
        ys.append(jnp.dot(w, xb, preferred_element_type=jnp.float32) + bc)

    # --- BatchNorm2d (training mode): biased per-channel stats over (B, N, K).
    #     Two-pass mean/var for numerical stability; reductions are lane-axis (XLU).
    L = ys[0].shape[-1]
    inv_count = 1.0 / float(B * L)
    s1 = ys[0].sum(axis=-1, keepdims=True)
    for yb in ys[1:]:
        s1 = s1 + yb.sum(axis=-1, keepdims=True)
    mean = s1 * inv_count                        # (d_out, 1)
    s2 = ((ys[0] - mean) ** 2).sum(axis=-1, keepdims=True)
    for yb in ys[1:]:
        s2 = s2 + ((yb - mean) ** 2).sum(axis=-1, keepdims=True)
    var = s2 * inv_count                         # (d_out, 1)

    scale = g_ref[...] * jax.lax.rsqrt(var + eps)    # (d_out, 1)
    shift = bt_ref[...] - mean * scale               # (d_out, 1)

    # --- Fused BN affine + ReLU + store (lane-dense (d_out, L) slabs).
    for b in range(B):
        o_ref[b] = jnp.maximum(ys[b] * scale + shift, 0.0)


def shared_mlp(x_nchw, w_conv, b_conv, gamma, beta, eps=1e-6):
    """x_nchw: (B, d_in, N, K) -> (B, d_out, N, K), matching the PyTorch module
    (Conv2d 1x1 + bias, train-mode BatchNorm2d(eps=1e-6), ReLU)."""
    B, d_in, N, K = x_nchw.shape
    d_out = w_conv.shape[0]
    L = N * K

    # Metadata-only reshapes — no XLA transpose HLOs around the kernel.
    x_flat = x_nchw.reshape(B, d_in, L)
    w2d = w_conv.reshape(d_out, d_in)

    kernel = functools.partial(_shared_mlp_kernel, B=B, eps=float(eps))
    vmem = pl.BlockSpec(memory_space=pltpu.MemorySpace.VMEM)

    out = pl.pallas_call(
        kernel,
        out_shape=jax.ShapeDtypeStruct((B, d_out, L), jnp.float32),
        in_specs=[vmem] * 5,
        out_specs=vmem,
    )(x_flat, w2d, b_conv.reshape(d_out, 1), gamma.reshape(d_out, 1),
      beta.reshape(d_out, 1))

    return out.reshape(B, d_out, N, K)


def reference(x_nchw, w_conv, b_conv, gamma, beta, eps=1e-6):
    """Pure-JAX reference mirroring the PyTorch forward (train-mode BN), using the
    same bf16-input / f32-accumulation matmul quantization as the kernel."""
    d_out, d_in = w_conv.shape[0], w_conv.shape[1]
    y = jnp.einsum('od,bdnk->bonk',
                   w_conv.reshape(d_out, d_in).astype(jnp.bfloat16),
                   x_nchw.astype(jnp.bfloat16),
                   preferred_element_type=jnp.float32)
    y = y + b_conv[None, :, None, None]
    mean = jnp.mean(y, axis=(0, 2, 3), keepdims=True)
    var = jnp.mean((y - mean) ** 2, axis=(0, 2, 3), keepdims=True)
    y = (y - mean) * jax.lax.rsqrt(var + eps) * gamma[None, :, None, None] \
        + beta[None, :, None, None]
    return jnp.maximum(y, 0.0)


if __name__ == "__main__":
    B, d_in, N, K, d_out = 2, 32, 16, 8, 64

    key = jax.random.PRNGKey(0)
    k1, k2, k3, k4, k5 = jax.random.split(key, 5)
    x = jax.random.normal(k1, (B, d_in, N, K), dtype=jnp.float32)
    # Deterministic synthetic parameters (shapes from the module __init__):
    w_conv = jax.random.normal(k2, (d_out, d_in), jnp.float32) / jnp.sqrt(d_in)  # Conv2d(d_in,d_out,1) weight (1x1 squeezed)
    b_conv = 0.1 * jax.random.normal(k3, (d_out,), jnp.float32)                  # Conv2d bias
    gamma = 1.0 + 0.1 * jax.random.normal(k4, (d_out,), jnp.float32)             # BN weight
    beta = 0.1 * jax.random.normal(k5, (d_out,), jnp.float32)                    # BN bias

    out = shared_mlp(x, w_conv, b_conv, gamma, beta)
    out = jax.block_until_ready(out)
    assert out.shape == (B, d_out, N, K), out.shape

    ref = reference(x, w_conv, b_conv, gamma, beta)
    np.testing.assert_allclose(np.asarray(out), np.asarray(ref), rtol=1e-3, atol=1e-3)

    print("KERNEL_OK")
</pallas_src>

<mosaic_0001>
module attributes {stable_mosaic.version = 11 : i64} {
  func.func @_shared_mlp_kernel(%arg0: memref<2x32x128xf32, #tpu.memory_space<vmem>>, %arg1: memref<64x32xf32, #tpu.memory_space<vmem>>, %arg2: memref<64x1xf32, #tpu.memory_space<vmem>>, %arg3: memref<64x1xf32, #tpu.memory_space<vmem>>, %arg4: memref<64x1xf32, #tpu.memory_space<vmem>>, %arg5: memref<2x64x128xf32, #tpu.memory_space<vmem>>) attributes {dimension_semantics = [], scalar_prefetch = 0 : i64, scratch_operands = 0 : i64, tpu.core_type = #tpu.core_type<tc>} {
    %c0 = arith.constant 0 : index
    %c0_0 = arith.constant 0 : index
    %0 = vector.load %arg1[%c0, %c0_0] : memref<64x32xf32, #tpu.memory_space<vmem>>, vector<64x32xf32>
    %1 = arith.truncf %0 : vector<64x32xf32> to vector<64x32xbf16>
    %c0_1 = arith.constant 0 : index
    %c0_2 = arith.constant 0 : index
    %2 = vector.load %arg2[%c0_1, %c0_2] : memref<64x1xf32, #tpu.memory_space<vmem>>, vector<64x1xf32>
    %c0_3 = arith.constant 0 : index
    %c0_4 = arith.constant 0 : index
    %c0_5 = arith.constant 0 : index
    %3 = vector.load %arg0[%c0_3, %c0_4, %c0_5] : memref<2x32x128xf32, #tpu.memory_space<vmem>>, vector<1x32x128xf32>
    %4 = vector.shape_cast %3 : vector<1x32x128xf32> to vector<32x128xf32>
    %5 = arith.truncf %4 : vector<32x128xf32> to vector<32x128xbf16>
    %cst = arith.constant dense<0.000000e+00> : vector<64x128xf32>
    %6 = tpu.matmul %1, %5, %cst {dimension_numbers = #tpu.dot_dimension_numbers<[1], [0], [0], [1], [0, 0, 1, 1], [], []>} : vector<64x32xbf16>, vector<32x128xbf16>, vector<64x128xf32> -> vector<64x128xf32>
    %7 = vector.broadcast %2 : vector<64x1xf32> to vector<64x128xf32>
    %8 = arith.addf %6, %7 : vector<64x128xf32>
    %c1 = arith.constant 1 : index
    %c0_6 = arith.constant 0 : index
    %c0_7 = arith.constant 0 : index
    %9 = vector.load %arg0[%c1, %c0_6, %c0_7] : memref<2x32x128xf32, #tpu.memory_space<vmem>>, vector<1x32x128xf32>
    %10 = vector.shape_cast %9 : vector<1x32x128xf32> to vector<32x128xf32>
    %11 = arith.truncf %10 : vector<32x128xf32> to vector<32x128xbf16>
    %cst_8 = arith.constant dense<0.000000e+00> : vector<64x128xf32>
    %12 = tpu.matmul %1, %11, %cst_8 {dimension_numbers = #tpu.dot_dimension_numbers<[1], [0], [0], [1], [0, 0, 1, 1], [], []>} : vector<64x32xbf16>, vector<32x128xbf16>, vector<64x128xf32> -> vector<64x128xf32>
    %13 = vector.broadcast %2 : vector<64x1xf32> to vector<64x128xf32>
    %14 = arith.addf %12, %13 : vector<64x128xf32>
    %cst_9 = arith.constant dense<0.000000e+00> : vector<64xf32>
    %15 = vector.multi_reduction <add>, %8, %cst_9 [1] : vector<64x128xf32> to vector<64xf32>
    %16 = vector.shape_cast %15 : vector<64xf32> to vector<64x1xf32>
    %cst_10 = arith.constant dense<0.000000e+00> : vector<64xf32>
    %17 = vector.multi_reduction <add>, %14, %cst_10 [1] : vector<64x128xf32> to vector<64xf32>
    %18 = vector.shape_cast %17 : vector<64xf32> to vector<64x1xf32>
    %19 = arith.addf %16, %18 : vector<64x1xf32>
    %cst_11 = arith.constant 3.906250e-03 : f32
    %20 = vector.broadcast %cst_11 : f32 to vector<64x1xf32>
    %21 = arith.mulf %19, %20 : vector<64x1xf32>
    %22 = vector.broadcast %21 : vector<64x1xf32> to vector<64x128xf32>
    %23 = arith.subf %8, %22 : vector<64x128xf32>
    %24 = arith.mulf %23, %23 : vector<64x128xf32>
    %cst_12 = arith.constant dense<0.000000e+00> : vector<64xf32>
    %25 = vector.multi_reduction <add>, %24, %cst_12 [1] : vector<64x128xf32> to vector<64xf32>
    %26 = vector.shape_cast %25 : vector<64xf32> to vector<64x1xf32>
    %27 = vector.broadcast %21 : vector<64x1xf32> to vector<64x128xf32>
    %28 = arith.subf %14, %27 : vector<64x128xf32>
    %29 = arith.mulf %28, %28 : vector<64x128xf32>
    %cst_13 = arith.constant dense<0.000000e+00> : vector<64xf32>
    %30 = vector.multi_reduction <add>, %29, %cst_13 [1] : vector<64x128xf32> to vector<64xf32>
    %31 = vector.shape_cast %30 : vector<64xf32> to vector<64x1xf32>
    %32 = arith.addf %26, %31 : vector<64x1xf32>
    %cst_14 = arith.constant 3.906250e-03 : f32
    %33 = vector.broadcast %cst_14 : f32 to vector<64x1xf32>
    %34 = arith.mulf %32, %33 : vector<64x1xf32>
    %c0_15 = arith.constant 0 : index
    %c0_16 = arith.constant 0 : index
    %35 = vector.load %arg3[%c0_15, %c0_16] : memref<64x1xf32, #tpu.memory_space<vmem>>, vector<64x1xf32>
    %cst_17 = arith.constant 9.99999997E-7 : f32
    %36 = vector.broadcast %cst_17 : f32 to vector<64x1xf32>
    %37 = arith.addf %34, %36 : vector<64x1xf32>
    %38 = math.rsqrt %37 : vector<64x1xf32>
    %39 = arith.mulf %35, %38 : vector<64x1xf32>
    %c0_18 = arith.constant 0 : index
    %c0_19 = arith.constant 0 : index
    %40 = vector.load %arg4[%c0_18, %c0_19] : memref<64x1xf32, #tpu.memory_space<vmem>>, vector<64x1xf32>
    %41 = arith.mulf %21, %39 : vector<64x1xf32>
    %42 = arith.subf %40, %41 : vector<64x1xf32>
    %43 = vector.broadcast %39 : vector<64x1xf32> to vector<64x128xf32>
    %44 = arith.mulf %8, %43 : vector<64x128xf32>
    %45 = vector.broadcast %42 : vector<64x1xf32> to vector<64x128xf32>
    %46 = arith.addf %44, %45 : vector<64x128xf32>
    %cst_20 = arith.constant 0.000000e+00 : f32
    %47 = vector.broadcast %cst_20 : f32 to vector<64x128xf32>
    %48 = arith.maximumf %46, %47 : vector<64x128xf32>
    %c0_21 = arith.constant 0 : index
    %c0_22 = arith.constant 0 : index
    %c0_23 = arith.constant 0 : index
    %49 = vector.load %arg5[%c0_21, %c0_22, %c0_23] : memref<2x64x128xf32, #tpu.memory_space<vmem>>, vector<1x64x128xf32>
    %50 = vector.shape_cast %49 : vector<1x64x128xf32> to vector<64x128xf32>
    %51 = vector.shape_cast %48 : vector<64x128xf32> to vector<1x64x128xf32>
    tpu.vector_store %arg5[%c0_21, %c0_22, %c0_23], %51 {strides = array<i32>} : memref<2x64x128xf32, #tpu.memory_space<vmem>>, vector<1x64x128xf32>,
    %52 = vector.broadcast %39 : vector<64x1xf32> to vector<64x128xf32>
    %53 = arith.mulf %14, %52 : vector<64x128xf32>
    %54 = vector.broadcast %42 : vector<64x1xf32> to vector<64x128xf32>
    %55 = arith.addf %53, %54 : vector<64x128xf32>
    %cst_24 = arith.constant 0.000000e+00 : f32
    %56 = vector.broadcast %cst_24 : f32 to vector<64x128xf32>
    %57 = arith.maximumf %55, %56 : vector<64x128xf32>
    %c1_25 = arith.constant 1 : index
    %c0_26 = arith.constant 0 : index
    %c0_27 = arith.constant 0 : index
    %58 = vector.load %arg5[%c1_25, %c0_26, %c0_27] : memref<2x64x128xf32, #tpu.memory_space<vmem>>, vector<1x64x128xf32>
    %59 = vector.shape_cast %58 : vector<1x64x128xf32> to vector<64x128xf32>
    %60 = vector.shape_cast %57 : vector<64x128xf32> to vector<1x64x128xf32>
    tpu.vector_store %arg5[%c1_25, %c0_26, %c0_27], %60 {strides = array<i32>} : memref<2x64x128xf32, #tpu.memory_space<vmem>>, vector<1x64x128xf32>,
    return
  }
}

</mosaic_0001>

<llo_original>
// kernel: tpu_custom_call.1
$region0: #{tpu_custom_call.1}
  #allocation0 [shape = 'u32[]', space=smem, size = 0x4, offset = 0x4, fixed_abs, tag = 'smem constant byte address 0x4 - core index']
  #allocation1 [shape = 'u32[72,128]{1,0:T(1,128)}', space=vmem, size = 0x9000, scoped, tag = 'internal scratch']
  %s0 = inlined_call_operand.vmem [shape: f32[2,32,128], index: 0, kind: input, shape index: {}]
  %s1 = inlined_call_operand.vmem [shape: f32[64,32], index: 1, kind: input, shape index: {}]
  %s2 = inlined_call_operand.vmem [shape: f32[64,1], index: 2, kind: input, shape index: {}]
  %s3 = inlined_call_operand.vmem [shape: f32[64,1], index: 3, kind: input, shape index: {}]
  %s4 = inlined_call_operand.vmem [shape: f32[64,1], index: 4, kind: input, shape index: {}]
  %s5 = inlined_call_operand.hbm [shape: f32[2,64,128], index: 5, kind: output, shape index: {}]
  %s6 = sld [smem:[#allocation0]]
  $region30: #{tpu_custom_call.1} parent=0
    _
  %s8 = ssub.s32 1, %s6
  %s9 = scalar_select 0, %s8, %s6
  $region1: #{tpu_custom_call.1} parent=0
    #allocation2 [shape = 'u8[65536]{0}', space=vmem, size = 0x10000, scoped, tag = 'output window, operand 0, single buffered']
    #allocation3 [shape = 's32[1]{0}', space=sflag, size = 0x4, scoped, tag = 'scoped memory for tpu_custom_call.1']
    %10 = vsyncpa [#allocation3], 0
    // Predicated region
    $region2: #{tpu_custom_call.1} parent=1 // pred_check
      _
    $region3: #{tpu_custom_call.1} parent=1 // pred_check_branch
      %12 = sbr.rel (0) target = $region5
    $region4: #{tpu_custom_call.1} parent=1 // pred_region
      _
    $region5: #{tpu_custom_call.1} parent=1 // pred_fallthru
      _
    // Predicated region
    $region6: #{tpu_custom_call.1} parent=1 // pred_check
      _
    $region7: #{tpu_custom_call.1} parent=1 // pred_check_branch
      %14 = sbr.rel (0) target = $region9
    $region8: #{tpu_custom_call.1} parent=1 // pred_region
      _
    $region9: #{tpu_custom_call.1} parent=1 // pred_fallthru
      _
    // Predicated region
    $region10: #{tpu_custom_call.1} parent=1 // pred_check
      _
    $region11: #{tpu_custom_call.1} parent=1 // pred_check_branch
      %16 = sbr.rel (0) target = $region13
    $region12: #{tpu_custom_call.1} parent=1 // pred_region
      _
    $region13: #{tpu_custom_call.1} parent=1 // pred_fallthru
      _
    // Predicated region
    $region14: #{tpu_custom_call.1} parent=1 // pred_check
      _
    $region15: #{tpu_custom_call.1} parent=1 // pred_check_branch
      %18 = sbr.rel (0) target = $region17
    $region16: #{tpu_custom_call.1} parent=1 // pred_region
      _
    $region17: #{tpu_custom_call.1} parent=1 // pred_fallthru
      _
    // Predicated region
    $region18: #{tpu_custom_call.1} parent=1 // pred_check
      _
    $region19: #{tpu_custom_call.1} parent=1 // pred_check_branch
      %20 = sbr.rel (0) target = $region21
    $region20: #{tpu_custom_call.1} parent=1 // pred_region
      _
    $region21: #{tpu_custom_call.1} parent=1 // pred_fallthru
      _
    %v22 = vld [vmem:[%s1] sm:$0xff]
    %v23 = vld [vmem:[%s1 + $0x8] sm:$0xff]
    %v24 = vld [vmem:[%s1 + $0x10] sm:$0xff]
    %v25 = vld [vmem:[%s1 + $0x18] sm:$0xff]
    %v26 = vld [vmem:[%s1 + $0x20] sm:$0xff]
    %v27 = vld [vmem:[%s1 + $0x28] sm:$0xff]
    %v28 = vld [vmem:[%s1 + $0x30] sm:$0xff]
    %v29 = vld [vmem:[%s1 + $0x38] sm:$0xff]
    %v30 = vpack.c.bf16 %v23, %v22
    %v31 = vpack.c.bf16 %v25, %v24
    %v32 = vpack.c.bf16 %v27, %v26
    %v33 = vpack.c.bf16 %v29, %v28
    %v34 = vld [vmem:[%s2] sm:$0xff]
    %v35 = vld [vmem:[%s2 + $0x8] sm:$0xff]
    %v36 = vld [vmem:[%s2 + $0x10] sm:$0xff]
    %v37 = vld [vmem:[%s2 + $0x18] sm:$0xff]
    %v38 = vld [vmem:[%s2 + $0x20] sm:$0xff]
    %v39 = vld [vmem:[%s2 + $0x28] sm:$0xff]
    %v40 = vld [vmem:[%s2 + $0x30] sm:$0xff]
    %v41 = vld [vmem:[%s2 + $0x38] sm:$0xff]
    %v42 = vld [vmem:[%s0] sm:$0xff]
    %v43 = vld [vmem:[%s0 + $0x8] sm:$0xff]
    %v44 = vld [vmem:[%s0 + $0x10] sm:$0xff]
    %v45 = vld [vmem:[%s0 + $0x18] sm:$0xff]
    %v46 = vpack.c.bf16 %v43, %v42
    %v47 = vpack.c.bf16 %v45, %v44
    %49 = vset.pattern.permute.xlu0 0
    %50 = vperm.xlu0 %49, %v34
    %v51 = vpop.permute.xlu0 %50
    %54 = vset.pattern.permute.xlu0 0
    %55 = vperm.xlu0 %54, %v35
    %v56 = vpop.permute.xlu0 %55
    %59 = vset.pattern.permute.xlu0 0
    %60 = vperm.xlu0 %59, %v36
    %v61 = vpop.permute.xlu0 %60
    %64 = vset.pattern.permute.xlu0 0
    %65 = vperm.xlu0 %64, %v37
    %v66 = vpop.permute.xlu0 %65
    %69 = vset.pattern.permute.xlu0 0
    %70 = vperm.xlu0 %69, %v38
    %v71 = vpop.permute.xlu0 %70
    %74 = vset.pattern.permute.xlu0 0
    %75 = vperm.xlu0 %74, %v39
    %v76 = vpop.permute.xlu0 %75
    %79 = vset.pattern.permute.xlu0 0
    %80 = vperm.xlu0 %79, %v40
    %v81 = vpop.permute.xlu0 %80
    %84 = vset.pattern.permute.xlu0 0
    %85 = vperm.xlu0 %84, %v41
    %v86 = vpop.permute.xlu0 %85
    %vm88 = vcmask 261120
    %v90 = vsel %vm88, %v30, 0
    %v93 = vsel %vm88, %v31, 0
    %v96 = vsel %vm88, %v32, 0
    %v99 = vsel %vm88, %v33, 0
    %101 = vmatpush.bf16.msra.mxu0 0
    %102 = vmatpush.bf16.msra.mxu0 0
    %103 = vmatpush.bf16.msra.mxu0 0
    %104 = vmatpush.bf16.msra.mxu0 0
    %105 = vmatpush.bf16.msra.mxu0 0
    %106 = vmatpush.bf16.msra.mxu0 0
    %107 = vmatpush.bf16.msra.mxu0 %v47
    %108 = vmatpush.bf16.msra.mxu0 %v46
    %109 = vmatmul.bf16.gmra.mxu0 %v90
    %v110 = vpop.f32.mrf.mxu0
    %v111 = vadd.f32 %v51, %v110
    %v112 = vpop.f32.mrf.mxu0
    %v113 = vadd.f32 %v56, %v112
    %114 = vmatmul.bf16.gmra.mxu0 %v93
    %v115 = vpop.f32.mrf.mxu0
    %v116 = vadd.f32 %v61, %v115
    %v117 = vpop.f32.mrf.mxu0
    %v118 = vadd.f32 %v66, %v117
    %119 = vmatmul.bf16.gmra.mxu0 %v96
    %v120 = vpop.f32.mrf.mxu0
    %v121 = vadd.f32 %v71, %v120
    %v122 = vpop.f32.mrf.mxu0
    %v123 = vadd.f32 %v76, %v122
    %124 = vmatmul.bf16.gmra.mxu0 %v99
    %v125 = vpop.f32.mrf.mxu0
    %v126 = vadd.f32 %v81, %v125
    %v127 = vpop.f32.mrf.mxu0
    %v128 = vadd.f32 %v86, %v127
    %129 = vdwg.mxu0
    %s130 = scalar_lea.vmem %s0, 32
    %v131 = vld [vmem:[%s130] sm:$0xff]
    %v132 = vld [vmem:[%s130 + $0x8] sm:$0xff]
    %v133 = vld [vmem:[%s130 + $0x10] sm:$0xff]
    %v134 = vld [vmem:[%s130 + $0x18] sm:$0xff]
    %v135 = vpack.c.bf16 %v132, %v131
    %v136 = vpack.c.bf16 %v134, %v133
    %137 = vmatpush.bf16.msra.mxu0 0
    %138 = vmatpush.bf16.msra.mxu0 0
    %139 = vmatpush.bf16.msra.mxu0 0
    %140 = vmatpush.bf16.msra.mxu0 0
    %141 = vmatpush.bf16.msra.mxu0 0
    %142 = vmatpush.bf16.msra.mxu0 0
    %143 = vmatpush.bf16.msra.mxu0 %v136
    %144 = vmatpush.bf16.msra.mxu0 %v135
    %145 = vmatmul.bf16.gmra.mxu0 %v90
    %v146 = vpop.f32.mrf.mxu0
    %v147 = vadd.f32 %v51, %v146
    %v148 = vpop.f32.mrf.mxu0
    %v149 = vadd.f32 %v56, %v148
    %150 = vmatmul.bf16.gmra.mxu0 %v93
    %v151 = vpop.f32.mrf.mxu0
    %v152 = vadd.f32 %v61, %v151
    %v153 = vpop.f32.mrf.mxu0
    %v154 = vadd.f32 %v66, %v153
    %155 = vmatmul.bf16.gmra.mxu0 %v96
    %v156 = vpop.f32.mrf.mxu0
    %v157 = vadd.f32 %v71, %v156
    %v158 = vpop.f32.mrf.mxu0
    %v159 = vadd.f32 %v76, %v158
    %160 = vmatmul.bf16.gmra.mxu0 %v99
    %v161 = vpop.f32.mrf.mxu0
    %v162 = vadd.f32 %v81, %v161
    %v163 = vpop.f32.mrf.mxu0
    %v164 = vadd.f32 %v86, %v163
    %165 = vdwg.mxu0
    %166 = vadd.xlane.f32.xlu0 %v111
    %v167 = vpop.xlane.xlu0 %166
    %168 = vadd.xlane.f32.xlu0 %v113
    %v169 = vpop.xlane.xlu0 %168
    %170 = vadd.xlane.f32.xlu0 %v116
    %v171 = vpop.xlane.xlu0 %170
    %172 = vadd.xlane.f32.xlu0 %v118
    %v173 = vpop.xlane.xlu0 %172
    %174 = vadd.xlane.f32.xlu0 %v121
    %v175 = vpop.xlane.xlu0 %174
    %176 = vadd.xlane.f32.xlu0 %v123
    %v177 = vpop.xlane.xlu0 %176
    %178 = vadd.xlane.f32.xlu0 %v126
    %v179 = vpop.xlane.xlu0 %178
    %180 = vadd.xlane.f32.xlu0 %v128
    %v181 = vpop.xlane.xlu0 %180
    %182 = vadd.xlane.f32.xlu0 %v147
    %v183 = vpop.xlane.xlu0 %182
    %184 = vadd.xlane.f32.xlu0 %v149
    %v185 = vpop.xlane.xlu0 %184
    %186 = vadd.xlane.f32.xlu0 %v152
    %v187 = vpop.xlane.xlu0 %186
    %188 = vadd.xlane.f32.xlu0 %v154
    %v189 = vpop.xlane.xlu0 %188
    %190 = vadd.xlane.f32.xlu0 %v157
    %v191 = vpop.xlane.xlu0 %190
    %192 = vadd.xlane.f32.xlu0 %v159
    %v193 = vpop.xlane.xlu0 %192
    %194 = vadd.xlane.f32.xlu0 %v162
    %v195 = vpop.xlane.xlu0 %194
    %196 = vadd.xlane.f32.xlu0 %v164
    %v197 = vpop.xlane.xlu0 %196
    %v198 = vadd.f32 %v167, %v183
    %v199 = vadd.f32 %v169, %v185
    %v200 = vadd.f32 %v171, %v187
    %v201 = vadd.f32 %v173, %v189
    %v202 = vadd.f32 %v175, %v191
    %v203 = vadd.f32 %v177, %v193
    %v204 = vadd.f32 %v179, %v195
    %v205 = vadd.f32 %v181, %v197
    %v206 = vmul.f32 %v198, 0.00390625
    %v207 = vmul.f32 %v199, 0.00390625
    %v208 = vmul.f32 %v200, 0.00390625
    %v209 = vmul.f32 %v201, 0.00390625
    %v210 = vmul.f32 %v202, 0.00390625
    %v211 = vmul.f32 %v203, 0.00390625
    %v212 = vmul.f32 %v204, 0.00390625
    %v213 = vmul.f32 %v205, 0.00390625
    %v214 = vsub.f32 %v111, %v206
    %v215 = vsub.f32 %v113, %v207
    %v216 = vsub.f32 %v116, %v208
    %v217 = vsub.f32 %v118, %v209
    %v218 = vsub.f32 %v121, %v210
    %v219 = vsub.f32 %v123, %v211
    %v220 = vsub.f32 %v126, %v212
    %v221 = vsub.f32 %v128, %v213
    %v222 = vmul.f32 %v214, %v214
    %v223 = vmul.f32 %v215, %v215
    %v224 = vmul.f32 %v216, %v216
    %v225 = vmul.f32 %v217, %v217
    %v226 = vmul.f32 %v218, %v218
    %v227 = vmul.f32 %v219, %v219
    %v228 = vmul.f32 %v220, %v220
    %v229 = vmul.f32 %v221, %v221
    %230 = vadd.xlane.f32.xlu0 %v222
    %v231 = vpop.xlane.xlu0 %230
    %232 = vadd.xlane.f32.xlu0 %v223
    %v233 = vpop.xlane.xlu0 %232
    %234 = vadd.xlane.f32.xlu0 %v224
    %v235 = vpop.xlane.xlu0 %234
    %236 = vadd.xlane.f32.xlu0 %v225
    %v237 = vpop.xlane.xlu0 %236
    %238 = vadd.xlane.f32.xlu0 %v226
    %v239 = vpop.xlane.xlu0 %238
    %240 = vadd.xlane.f32.xlu0 %v227
    %v241 = vpop.xlane.xlu0 %240
    %242 = vadd.xlane.f32.xlu0 %v228
    %v243 = vpop.xlane.xlu0 %242
    %244 = vadd.xlane.f32.xlu0 %v229
    %v245 = vpop.xlane.xlu0 %244
    %v246 = vsub.f32 %v147, %v206
    %v247 = vsub.f32 %v149, %v207
    %v248 = vsub.f32 %v152, %v208
    %v249 = vsub.f32 %v154, %v209
    %v250 = vsub.f32 %v157, %v210
    %v251 = vsub.f32 %v159, %v211
    %v252 = vsub.f32 %v162, %v212
    %v253 = vsub.f32 %v164, %v213
    %v254 = vmul.f32 %v246, %v246
    %v255 = vmul.f32 %v247, %v247
    %v256 = vmul.f32 %v248, %v248
    %v257 = vmul.f32 %v249, %v249
    %v258 = vmul.f32 %v250, %v250
    %v259 = vmul.f32 %v251, %v251
    %v260 = vmul.f32 %v252, %v252
    %v261 = vmul.f32 %v253, %v253
    %262 = vadd.xlane.f32.xlu0 %v254
    %v263 = vpop.xlane.xlu0 %262
    %264 = vadd.xlane.f32.xlu0 %v255
    %v265 = vpop.xlane.xlu0 %264
    %266 = vadd.xlane.f32.xlu0 %v256
    %v267 = vpop.xlane.xlu0 %266
    %268 = vadd.xlane.f32.xlu0 %v257
    %v269 = vpop.xlane.xlu0 %268
    %270 = vadd.xlane.f32.xlu0 %v258
    %v271 = vpop.xlane.xlu0 %270
    %272 = vadd.xlane.f32.xlu0 %v259
    %v273 = vpop.xlane.xlu0 %272
    %274 = vadd.xlane.f32.xlu0 %v260
    %v275 = vpop.xlane.xlu0 %274
    %276 = vadd.xlane.f32.xlu0 %v261
    %v277 = vpop.xlane.xlu0 %276
    %v278 = vadd.f32 %v231, %v263
    %v279 = vadd.f32 %v233, %v265
    %v280 = vadd.f32 %v235, %v267
    %v281 = vadd.f32 %v237, %v269
    %v282 = vadd.f32 %v239, %v271
    %v283 = vadd.f32 %v241, %v273
    %v284 = vadd.f32 %v243, %v275
    %v285 = vadd.f32 %v245, %v277
    %v286 = vmul.f32 %v278, 0.00390625
    %v287 = vmul.f32 %v279, 0.00390625
    %v288 = vmul.f32 %v280, 0.00390625
    %v289 = vmul.f32 %v281, 0.00390625
    %v290 = vmul.f32 %v282, 0.00390625
    %v291 = vmul.f32 %v283, 0.00390625
    %v292 = vmul.f32 %v284, 0.00390625
    %v293 = vmul.f32 %v285, 0.00390625
    %v294 = vld [vmem:[%s3] sm:$0xff]
    %v295 = vld [vmem:[%s3 + $0x8] sm:$0xff]
    %v296 = vld [vmem:[%s3 + $0x10] sm:$0xff]
    %v297 = vld [vmem:[%s3 + $0x18] sm:$0xff]
    %v298 = vld [vmem:[%s3 + $0x20] sm:$0xff]
    %v299 = vld [vmem:[%s3 + $0x28] sm:$0xff]
    %v300 = vld [vmem:[%s3 + $0x30] sm:$0xff]
    %v301 = vld [vmem:[%s3 + $0x38] sm:$0xff]
    %v302 = vadd.f32 %v286, 1e-06
    %v303 = vadd.f32 %v287, 1e-06
    %v304 = vadd.f32 %v288, 1e-06
    %v305 = vadd.f32 %v289, 1e-06
    %v306 = vadd.f32 %v290, 1e-06
    %v307 = vadd.f32 %v291, 1e-06
    %v308 = vadd.f32 %v292, 1e-06
    %v309 = vadd.f32 %v293, 1e-06
    %v310 = vrsqrt.pop %v302
    %v311 = vmul.f32 %v310, %v302
    %v312 = vmul.f32 %v311, %v310
    %v313 = vmul.f32 0.5, %v312
    %v314 = vsub.f32 1.5, %v313
    %v315 = vmul.f32 %v310, %v314
    %vm316 = vweird.f32 %v302
    %vm317 = vweird.f32 %v310
    %vm318 = vmor %vm316, %vm317
    %v319 = vsel %vm318, %v310, %v315
    %v320 = vrsqrt.pop %v303
    %v321 = vmul.f32 %v320, %v303
    %v322 = vmul.f32 %v321, %v320
    %v323 = vmul.f32 0.5, %v322
    %v324 = vsub.f32 1.5, %v323
    %v325 = vmul.f32 %v320, %v324
    %vm326 = vweird.f32 %v303
    %vm327 = vweird.f32 %v320
    %vm328 = vmor %vm326, %vm327
    %v329 = vsel %vm328, %v320, %v325
    %v330 = vrsqrt.pop %v304
    %v331 = vmul.f32 %v330, %v304
    %v332 = vmul.f32 %v331, %v330
    %v333 = vmul.f32 0.5, %v332
    %v334 = vsub.f32 1.5, %v333
    %v335 = vmul.f32 %v330, %v334
    %vm336 = vweird.f32 %v304
    %vm337 = vweird.f32 %v330
    %vm338 = vmor %vm336, %vm337
    %v339 = vsel %vm338, %v330, %v335
    %v340 = vrsqrt.pop %v305
    %v341 = vmul.f32 %v340, %v305
    %v342 = vmul.f32 %v341, %v340
    %v343 = vmul.f32 0.5, %v342
    %v344 = vsub.f32 1.5, %v343
    %v345 = vmul.f32 %v340, %v344
    %vm346 = vweird.f32 %v305
    %vm347 = vweird.f32 %v340
    %vm348 = vmor %vm346, %vm347
    %v349 = vsel %vm348, %v340, %v345
    %v350 = vrsqrt.pop %v306
    %v351 = vmul.f32 %v350, %v306
    %v352 = vmul.f32 %v351, %v350
    %v353 = vmul.f32 0.5, %v352
    %v354 = vsub.f32 1.5, %v353
    %v355 = vmul.f32 %v350, %v354
    %vm356 = vweird.f32 %v306
    %vm357 = vweird.f32 %v350
    %vm358 = vmor %vm356, %vm357
    %v359 = vsel %vm358, %v350, %v355
    %v360 = vrsqrt.pop %v307
    %v361 = vmul.f32 %v360, %v307
    %v362 = vmul.f32 %v361, %v360
    %v363 = vmul.f32 0.5, %v362
    %v364 = vsub.f32 1.5, %v363
    %v365 = vmul.f32 %v360, %v364
    %vm366 = vweird.f32 %v307
    %vm367 = vweird.f32 %v360
    %vm368 = vmor %vm366, %vm367
    %v369 = vsel %vm368, %v360, %v365
    %v370 = vrsqrt.pop %v308
    %v371 = vmul.f32 %v370, %v308
    %v372 = vmul.f32 %v371, %v370
    %v373 = vmul.f32 0.5, %v372
    %v374 = vsub.f32 1.5, %v373
    %v375 = vmul.f32 %v370, %v374
    %vm376 = vweird.f32 %v308
    %vm377 = vweird.f32 %v370
    %vm378 = vmor %vm376, %vm377
    %v379 = vsel %vm378, %v370, %v375
    %v380 = vrsqrt.pop %v309
    %v381 = vmul.f32 %v380, %v309
    %v382 = vmul.f32 %v381, %v380
    %v383 = vmul.f32 0.5, %v382
    %v384 = vsub.f32 1.5, %v383
    %v385 = vmul.f32 %v380, %v384
    %vm386 = vweird.f32 %v309
    %vm387 = vweird.f32 %v380
    %vm388 = vmor %vm386, %vm387
    %v389 = vsel %vm388, %v380, %v385
    %v390 = vmul.f32 %v294, %v319
    %v391 = vmul.f32 %v295, %v329
    %v392 = vmul.f32 %v296, %v339
    %v393 = vmul.f32 %v297, %v349
    %v394 = vmul.f32 %v298, %v359
    %v395 = vmul.f32 %v299, %v369
    %v396 = vmul.f32 %v300, %v379
    %v397 = vmul.f32 %v301, %v389
    %v398 = vld [vmem:[%s4] sm:$0xff]
    %v399 = vld [vmem:[%s4 + $0x8] sm:$0xff]
    %v400 = vld [vmem:[%s4 + $0x10] sm:$0xff]
    %v401 = vld [vmem:[%s4 + $0x18] sm:$0xff]
    %v402 = vld [vmem:[%s4 + $0x20] sm:$0xff]
    %v403 = vld [vmem:[%s4 + $0x28] sm:$0xff]
    %v404 = vld [vmem:[%s4 + $0x30] sm:$0xff]
    %v405 = vld [vmem:[%s4 + $0x38] sm:$0xff]
    %v406 = vmul.f32 %v206, %v390
    %v407 = vmul.f32 %v207, %v391
    %v408 = vmul.f32 %v208, %v392
    %v409 = vmul.f32 %v209, %v393
    %v410 = vmul.f32 %v210, %v394
    %v411 = vmul.f32 %v211, %v395
    %v412 = vmul.f32 %v212, %v396
    %v413 = vmul.f32 %v213, %v397
    %v414 = vsub.f32 %v398, %v406
    %v415 = vsub.f32 %v399, %v407
    %v416 = vsub.f32 %v400, %v408
    %v417 = vsub.f32 %v401, %v409
    %v418 = vsub.f32 %v402, %v410
    %v419 = vsub.f32 %v403, %v411
    %v420 = vsub.f32 %v404, %v412
    %v421 = vsub.f32 %v405, %v413
    %423 = vset.pattern.permute.xlu0 0
    %424 = vperm.xlu0 %423, %v390
    %v425 = vpop.permute.xlu0 %424
    %428 = vset.pattern.permute.xlu0 0
    %429 = vperm.xlu0 %428, %v391
    %v430 = vpop.permute.xlu0 %429
    %433 = vset.pattern.permute.xlu0 0
    %434 = vperm.xlu0 %433, %v392
    %v435 = vpop.permute.xlu0 %434
    %438 = vset.pattern.permute.xlu0 0
    %439 = vperm.xlu0 %438, %v393
    %v440 = vpop.permute.xlu0 %439
    %443 = vset.pattern.permute.xlu0 0
    %444 = vperm.xlu0 %443, %v394
    %v445 = vpop.permute.xlu0 %444
    %448 = vset.pattern.permute.xlu0 0
    %449 = vperm.xlu0 %448, %v395
    %v450 = vpop.permute.xlu0 %449
    %453 = vset.pattern.permute.xlu0 0
    %454 = vperm.xlu0 %453, %v396
    %v455 = vpop.permute.xlu0 %454
    %458 = vset.pattern.permute.xlu0 0
    %459 = vperm.xlu0 %458, %v397
    %v460 = vpop.permute.xlu0 %459
    %v462 = vmul.f32 %v111, %v425
    %v463 = vmul.f32 %v113, %v430
    %v464 = vmul.f32 %v116, %v435
    %v465 = vmul.f32 %v118, %v440
    %v466 = vmul.f32 %v121, %v445
    %v467 = vmul.f32 %v123, %v450
    %v468 = vmul.f32 %v126, %v455
    %v469 = vmul.f32 %v128, %v460
    %471 = vset.pattern.permute.xlu0 0
    %472 = vperm.xlu0 %471, %v414
    %v473 = vpop.permute.xlu0 %472
    %476 = vset.pattern.permute.xlu0 0
    %477 = vperm.xlu0 %476, %v415
    %v478 = vpop.permute.xlu0 %477
    %481 = vset.pattern.permute.xlu0 0
    %482 = vperm.xlu0 %481, %v416
    %v483 = vpop.permute.xlu0 %482
    %486 = vset.pattern.permute.xlu0 0
    %487 = vperm.xlu0 %486, %v417
    %v488 = vpop.permute.xlu0 %487
    %491 = vset.pattern.permute.xlu0 0
    %492 = vperm.xlu0 %491, %v418
    %v493 = vpop.permute.xlu0 %492
    %496 = vset.pattern.permute.xlu0 0
    %497 = vperm.xlu0 %496, %v419
    %v498 = vpop.permute.xlu0 %497
    %501 = vset.pattern.permute.xlu0 0
    %502 = vperm.xlu0 %501, %v420
    %v503 = vpop.permute.xlu0 %502
    %506 = vset.pattern.permute.xlu0 0
    %507 = vperm.xlu0 %506, %v421
    %v508 = vpop.permute.xlu0 %507
    %v510 = vadd.f32 %v462, %v473
    %v511 = vadd.f32 %v463, %v478
    %v512 = vadd.f32 %v464, %v483
    %v513 = vadd.f32 %v465, %v488
    %v514 = vadd.f32 %v466, %v493
    %v515 = vadd.f32 %v467, %v498
    %v516 = vadd.f32 %v468, %v503
    %v517 = vadd.f32 %v469, %v508
    %v518 = vmax.f32 %v510, 0.0
    %v519 = vmax.f32 %v511, 0.0
    %v520 = vmax.f32 %v512, 0.0
    %v521 = vmax.f32 %v513, 0.0
    %v522 = vmax.f32 %v514, 0.0
    %v523 = vmax.f32 %v515, 0.0
    %v524 = vmax.f32 %v516, 0.0
    %v525 = vmax.f32 %v517, 0.0
    %526 = vst [vmem:[#allocation2] sm:$0xff] %v518
    %527 = vst [vmem:[#allocation2 + $0x8] sm:$0xff] %v519
    %528 = vst [vmem:[#allocation2 + $0x10] sm:$0xff] %v520
    %529 = vst [vmem:[#allocation2 + $0x18] sm:$0xff] %v521
    %530 = vst [vmem:[#allocation2 + $0x20] sm:$0xff] %v522
    %531 = vst [vmem:[#allocation2 + $0x28] sm:$0xff] %v523
    %532 = vst [vmem:[#allocation2 + $0x30] sm:$0xff] %v524
    %533 = vst [vmem:[#allocation2 + $0x38] sm:$0xff] %v525
    %v534 = vmul.f32 %v147, %v425
    %v535 = vmul.f32 %v149, %v430
    %v536 = vmul.f32 %v152, %v435
    %v537 = vmul.f32 %v154, %v440
    %v538 = vmul.f32 %v157, %v445
    %v539 = vmul.f32 %v159, %v450
    %v540 = vmul.f32 %v162, %v455
    %v541 = vmul.f32 %v164, %v460
    %v542 = vadd.f32 %v534, %v473
    %v543 = vadd.f32 %v535, %v478
    %v544 = vadd.f32 %v536, %v483
    %v545 = vadd.f32 %v537, %v488
    %v546 = vadd.f32 %v538, %v493
    %v547 = vadd.f32 %v539, %v498
    %v548 = vadd.f32 %v540, %v503
    %v549 = vadd.f32 %v541, %v508
    %v550 = vmax.f32 %v542, 0.0
    %v551 = vmax.f32 %v543, 0.0
    %v552 = vmax.f32 %v544, 0.0
    %v553 = vmax.f32 %v545, 0.0
    %v554 = vmax.f32 %v546, 0.0
    %v555 = vmax.f32 %v547, 0.0
    %v556 = vmax.f32 %v548, 0.0
    %v557 = vmax.f32 %v549, 0.0
    %s558 = scalar_lea.vmem [#allocation2], 64
    %559 = vst [vmem:[%s558] sm:$0xff] %v550
    %560 = vst [vmem:[%s558 + $0x8] sm:$0xff] %v551
    %561 = vst [vmem:[%s558 + $0x10] sm:$0xff] %v552
    %562 = vst [vmem:[%s558 + $0x18] sm:$0xff] %v553
    %563 = vst [vmem:[%s558 + $0x20] sm:$0xff] %v554
    %564 = vst [vmem:[%s558 + $0x28] sm:$0xff] %v555
    %565 = vst [vmem:[%s558 + $0x30] sm:$0xff] %v556
    %566 = vst [vmem:[%s558 + $0x38] sm:$0xff] %v557
    // Predicated region
    $region22: #{tpu_custom_call.1} parent=1 // pred_check
      _
    $region23: #{tpu_custom_call.1} parent=1 // pred_check_branch
      %568 = sbr.rel (0) target = $region25
    $region24: #{tpu_custom_call.1} parent=1 // pred_region
      %570 = vsyncadd [#allocation3], 0
      %s571 = sshll.u32 [#allocation2], 4
      %s572 = int_to_ptr.vmem [resolvable:$true] %s571
      %s573 = sshll.u32 %s5, 4
      %s574 = int_to_ptr.hbm [resolvable:$true] %s573
      %579 = dma.vmem_to_hbm [thread:$0]  %s572, 2048, %s574, [#allocation3], 128, 128, 8
    $region25: #{tpu_custom_call.1} parent=1 // pred_fallthru
      _
    // Predicated region
    $region26: #{tpu_custom_call.1} parent=1 // pred_check
      _
    $region27: #{tpu_custom_call.1} parent=1 // pred_check_branch
      %581 = sbr.rel (0) target = $region29
    $region28: #{tpu_custom_call.1} parent=1 // pred_region
      %583 = dma.done [#allocation3], 2048
    $region29: #{tpu_custom_call.1} parent=1 // pred_fallthru
      _
    %584 = vsyncpa [#allocation3], 1

</llo_original>
